<compile_context>
chip_gen: v7x
topology: tpu7x:2x2x1
jax: 0.10.0
libtpu: 0.0.40
codegen_flags: <defaults>
</compile_context>

<pallas_src>
import functools
import numpy as np

import jax
import jax.numpy as jnp
from jax.experimental import pallas as pl
from jax.experimental.pallas import tpu as pltpu

MAX_NUM_CENTERS = 100
CENTER_IGNORE_PX = 3
CENTER_GT_BLUR_SIGMA = 2
ROW_TILE_TARGET_PX = 65536     # pixels per (TR, W) tile (~3.7 MiB of blocks incl. double-buffering)


def _pick_row_tile(H, W, target_px=ROW_TILE_TARGET_PX):
    """Largest row tile TR (multiple of 8, divides H) with TR*W <= target_px."""
    if H * W <= target_px:
        return H
    divisors = [d for d in range(8, H, 8) if H % d == 0]
    if not divisors:
        # TODO(synk): pad H to a multiple of 8 in the wrapper instead of whole-image tiles.
        return H
    fitting = [d for d in divisors if d * W <= target_px]
    return max(fitting) if fitting else min(divisors)


def _atan2(y, x):
    """atan2 built from VPU-only ops (Cephes atanf poly + range reduction), |err| ~ 1e-7 rad."""
    ax = jnp.abs(x)
    ay = jnp.abs(y)
    mn = jnp.minimum(ax, ay)
    mx = jnp.maximum(ax, ay)
    big = mn > jnp.float32(0.41421356237) * mx            # tan(pi/8) range split
    num = jnp.where(big, mn - mx, mn)
    den = jnp.maximum(jnp.where(big, mn + mx, mx), jnp.float32(1e-30))
    z = num / den                                         # |z| <= tan(pi/8)
    s = z * z
    p = ((jnp.float32(8.05374449538e-2) * s - jnp.float32(1.38776856032e-1)) * s
         + jnp.float32(1.99777106478e-1)) * s - jnp.float32(3.33329491539e-1)
    r = p * s * z + z
    r = jnp.where(big, r + jnp.float32(np.pi / 4), r)
    r = jnp.where(ay > ax, jnp.float32(np.pi / 2) - r, r)
    r = jnp.where(x < 0.0, jnp.float32(np.pi) - r, r)
    return jnp.where(y < 0.0, -r, r)


def centerdir_kernel(meta_ref, cent_ref, inst_ref, maps_ref, pres_ref, *,
                     tr, c_pad, ignore_px):
    """One (batch, row-tile) step: per-pixel center lookup + full 13-channel groundtruth write."""
    b = pl.program_id(0)
    t = pl.program_id(1)
    multi = meta_ref[b, 0]        # "more than one unique instance id" (hoisted to the wrapper)
    n_ids = meta_ref[b, 1]        # min(max instance id, MAX_NUM_CENTERS)
    shape = (maps_ref.shape[2], maps_ref.shape[3])        # (TR, W), sublane-filled

    @pl.when(multi > 0)
    def _heavy():
        inst = inst_ref[0]                                              # (TR, W) int32
        # integer pixel-coordinate maps generated in-kernel (no xym HBM read).
        row = (jax.lax.broadcasted_iota(jnp.int32, shape, 0) + t * tr).astype(jnp.float32)
        col = jax.lax.broadcasted_iota(jnp.int32, shape, 1).astype(jnp.float32)
        kvec = jax.lax.broadcasted_iota(jnp.int32, (1, c_pad), 1)

        # Loop only over ids that can be present (typically O(10)); fully packed (TR, W)
        # selects on the VPU, scalar center reads from SMEM, presence on the (idle) XLU.
        def body(k, carry):
            c0, c1, pres = carry
            m = inst == (k + 1)
            c0 = jnp.where(m, cent_ref[b, 0, k], c0)
            c1 = jnp.where(m, cent_ref[b, 1, k], c1)
            present = jnp.max(jnp.max(m.astype(jnp.float32), axis=1, keepdims=True),
                              axis=0, keepdims=True)                    # (1, 1)
            pres = jnp.maximum(pres, jnp.where(kvec == k, present, jnp.float32(0.0)))
            return c0, c1, pres

        init = (jnp.full(shape, -10000.0, jnp.float32),
                jnp.full(shape, -10000.0, jnp.float32),
                jnp.zeros((1, c_pad), jnp.float32))
        c0, c1, pres_row = jax.lax.fori_loop(0, n_ids, body, init)

        gt_X = c1 - row                    # gt_center_x - xym_s[1]   (reference convention)
        gt_Y = c0 - col                    # gt_center_y - xym_s[0]
        maskf = (inst > 0).astype(jnp.float32)

        near = jnp.logical_and(jnp.abs(gt_X) < ignore_px, jnp.abs(gt_Y) < ignore_px)
        nearf = near.astype(jnp.float32)

        # One EUP rsqrt replaces sqrt + two divides; reference's sin/cos re-normalization
        # by sqrt(sin^2+cos^2) == 1 is dropped.
        r2 = gt_X * gt_X + gt_Y * gt_Y
        pos = r2 > 0.0
        inv = jax.lax.rsqrt(jnp.where(pos, r2, jnp.float32(1.0)))
        gt_R = (r2 * inv) * maskf
        sin_t = jnp.where(pos, gt_Y * inv, jnp.float32(0.0)) * maskf
        cos_t = jnp.where(pos, gt_X * inv, jnp.float32(1.0)) * maskf
        theta = _atan2(gt_Y, gt_X)

        zeros = jnp.zeros(shape, jnp.float32)
        maps_ref[0, 0] = gt_R
        maps_ref[0, 1] = theta
        maps_ref[0, 2] = sin_t
        maps_ref[0, 3] = cos_t
        maps_ref[0, 4] = 1.0 - nearf       # gt_center_ignore
        maps_ref[0, 5] = nearf             # blur input; overwritten in place by the blur kernel
        for c in range(6, 13):             # orientation / confidence channels (orientation=None)
            maps_ref[0, c] = zeros
        pres_ref[0, 0] = pres_row

    @pl.when(multi == 0)
    def _light():
        # single-instance / empty image: pure constant stores, no per-pixel math at all.
        zeros = jnp.zeros(shape, jnp.float32)
        for c in range(13):
            maps_ref[0, c] = jnp.ones(shape, jnp.float32) if c == 4 else zeros
        pres_ref[...] = jnp.zeros_like(pres_ref)


def gaussian_blur_kernel(src_ref, gv_ref, gh_ref, out_ref):
    """Separable reflect-padded gaussian as two bf16 MXU matmuls + max-normalization.

    Reads channel 5 (= 1 - gt_center_ignore) of the 13-channel tensor and writes the
    blurred, normalized gt_center_mask back into the same channel (input_output_aliases)."""
    img = src_ref[0, 0].astype(jnp.bfloat16)                                  # (H, W)
    v = jnp.dot(gv_ref[...], img, preferred_element_type=jnp.float32)          # vertical pass
    acc = jnp.dot(v.astype(jnp.bfloat16), gh_ref[...],
                  preferred_element_type=jnp.float32)                          # horizontal pass
    mx = jnp.max(jnp.max(acc, axis=1, keepdims=True), axis=0, keepdims=True)
    nz = (mx > 0.0).astype(jnp.float32)      # reference: mask stays zero when ignore.all()
    out_ref[0, 0] = acc * (nz / jnp.maximum(mx, jnp.float32(1e-30)))


def _gaussian_1d(sigma):
    # GaussianLayer(sigma): ReflectionPad2d(4*sigma) + Conv2d(8*sigma+1) with outer(g, g) weights.
    k = 8 * sigma + 1
    r = 4 * sigma
    g = np.exp(-((np.arange(k, dtype=np.float64) - r) ** 2) / (2.0 * sigma ** 2))
    return g / g.sum(), r


def _reflect_blur_matrix(n, g, r):
    # out[i] = sum_d g[d] * in[reflect(i + d - r)]   (torch ReflectionPad2d semantics)
    M = np.zeros((n, n), np.float64)
    for i in range(n):
        for d in range(len(g)):
            j = i + d - r
            if j < 0:
                j = -j
            elif j >= n:
                j = 2 * (n - 1) - j
            j = min(max(j, 0), n - 1)
            M[i, j] += g[d]
    return M.astype(np.float32)


class CenterDirGroundtruthPallas:
    def __init__(self, MAX_NUM_CENTERS=100, center_ignore_px=3, center_gt_blur=2):
        self.MAX_NUM_CENTERS = MAX_NUM_CENTERS
        self.center_ignore_px = center_ignore_px   # TODO(synk): center_ignore_px <= 0 path not implemented
        self.g1d, self.blur_r = _gaussian_1d(center_gt_blur)
        self.C_PAD = max(128, ((MAX_NUM_CENTERS + 127) // 128) * 128)
        self._blur_mats = {}

    def _blur_matrices(self, H, W):
        key = (H, W)
        if key not in self._blur_mats:
            # bf16 weights: f32 matmul is emulated multi-pass on the MXU; the blur input is a
            # 0/1 mask and the output is max-normalized, so bf16 is numerically safe here.
            # TODO(synk): for H,W >~ 1k switch to banded (halo-tiled) blur instead of dense matrices.
            gv = _reflect_blur_matrix(H, self.g1d, self.blur_r)        # out = gv @ img
            gh = _reflect_blur_matrix(W, self.g1d, self.blur_r).T      # out = img @ gh
            self._blur_mats[key] = (jnp.asarray(gv, jnp.bfloat16),
                                    jnp.asarray(gh, jnp.bfloat16))
        return self._blur_mats[key]

    def __call__(self, sample, batch_index):
        instances = sample['instance']                 # (B, 1, H, W) int
        centers = sample.get('center')                 # (B, MAX, 2) float or None
        B, _, H, W = instances.shape
        inst = instances[:, 0].astype(jnp.int32)       # (B, H, W)

        if centers is None:
            # TODO(synk): centers=None per-instance mean-over-coordinates path not implemented.
            centers = jnp.zeros((B, self.MAX_NUM_CENTERS, 2), jnp.float32)
        assert centers.shape[1] == self.MAX_NUM_CENTERS, \
            'ERROR: Different number of MAX_NUM_CENTERS detected!!'
        centers = centers.astype(jnp.float32)

        # per-image scalars: hoisted "len(unique(instances)) > 1" gate and loop bound
        inst_max = inst.max(axis=(1, 2))
        inst_min = inst.min(axis=(1, 2))
        multi = inst_max != inst_min
        n_ids = jnp.clip(inst_max, 0, self.MAX_NUM_CENTERS)
        meta = jnp.stack([multi.astype(jnp.int32), n_ids.astype(jnp.int32)], axis=1)   # (B, 2)

        cent_tab = jnp.transpose(centers, (0, 2, 1))   # (B, 2, MAX): row0 = center[:,0], row1 = center[:,1]

        TR = _pick_row_tile(H, W)
        T = H // TR

        kernel = functools.partial(centerdir_kernel, tr=TR, c_pad=self.C_PAD,
                                   ignore_px=float(self.center_ignore_px))
        grid_spec = pltpu.PrefetchScalarGridSpec(
            num_scalar_prefetch=1,
            grid=(B, T),
            in_specs=[
                pl.BlockSpec(memory_space=pltpu.MemorySpace.SMEM),           # centers (scalar reads)
                pl.BlockSpec((1, TR, W), lambda b, t, m: (b, t, 0)),         # instance ids
            ],
            out_specs=[
                pl.BlockSpec((1, 13, TR, W), lambda b, t, m: (b, 0, t, 0)),  # final 13-ch groundtruth
                pl.BlockSpec((1, 1, 1, self.C_PAD),
                             lambda b, t, m: (b, t, 0, 0)),                  # per-tile presence
            ],
        )
        maps13, pres = pl.pallas_call(
            kernel,
            grid_spec=grid_spec,
            out_shape=(
                jax.ShapeDtypeStruct((B, 13, H, W), jnp.float32),
                jax.ShapeDtypeStruct((B, T, 1, self.C_PAD), jnp.float32),
            ),
            compiler_params=pltpu.CompilerParams(
                dimension_semantics=("parallel", "parallel")),   # per-tile presence -> no cross-tile dep
        )(meta, cent_tab, inst)

        # gt_center_mask: blurred (1 - ignore), written in place into channel 5 (no concat pass).
        gv, gh = self._blur_matrices(H, W)
        maps13 = pl.pallas_call(
            gaussian_blur_kernel,
            grid=(B,),
            in_specs=[
                pl.BlockSpec((1, 1, H, W), lambda b: (b, 5, 0, 0)),
                pl.BlockSpec((H, H), lambda b: (0, 0), pipeline_mode=pl.Buffered(1)),
                pl.BlockSpec((W, W), lambda b: (0, 0), pipeline_mode=pl.Buffered(1)),
            ],
            out_specs=pl.BlockSpec((1, 1, H, W), lambda b: (b, 5, 0, 0)),
            out_shape=jax.ShapeDtypeStruct((B, 13, H, W), jnp.float32),
            input_output_aliases={0: 0},
            compiler_params=pltpu.CompilerParams(dimension_semantics=("parallel",)),
            # TODO(synk): set vmem_limit_bytes + banded blur for very large H,W (v7x 64 MiB VMEM).
        )(maps13, gv, gh)

        mat = maps13.reshape(B, 13, 1, H, W)

        # gt_centers[b, id] = centers[b, id-1, ::-1] for every instance id present in image b
        # (only for multi-instance images, matching the reference).
        presence = jnp.max(pres, axis=1)[:, 0, :]                 # (B, C_PAD)
        n = self.MAX_NUM_CENTERS
        cond = (presence[:, :n - 1] > 0.5) & multi[:, None]
        rows = jnp.where(cond[..., None], centers[:, :n - 1, ::-1], 0.0)
        gt_centers = jnp.concatenate([jnp.zeros((B, 1, 2), jnp.float32), rows], axis=1)

        extended_instances = jnp.zeros((B, H, W), jnp.int16)   # reference also leaves these at zero
        centerdir_gt = [mat, [0] * B, gt_centers, [0] * B, extended_instances]
        if 'instance_polygon' in sample:
            centerdir_gt.append(sample['instance_polygon'])
        sample['centerdir_groundtruth'] = centerdir_gt
        return sample


def _reference_maps(inst, centers, ignore_px, g1d, blur_r):
    """Pure-numpy model of the implemented forward path (self-test only)."""
    B, H, W = inst.shape
    n_max = centers.shape[1]
    maps = np.zeros((B, 13, H, W), np.float64)
    ref_centers = np.zeros((B, n_max, 2), np.float64)
    gvm = _reflect_blur_matrix(H, g1d, blur_r).astype(np.float64)
    ghm = _reflect_blur_matrix(W, g1d, blur_r).astype(np.float64).T
    row = np.broadcast_to(np.arange(H, dtype=np.float64)[:, None], (H, W))
    col = np.broadcast_to(np.arange(W, dtype=np.float64)[None, :], (H, W))
    for b in range(B):
        if inst[b].max() == inst[b].min():
            maps[b, 4] = 1.0
            continue
        c0 = np.full((H, W), -10000.0)
        c1 = np.full((H, W), -10000.0)
        for k in np.unique(inst[b]):
            if k <= 0 or k > n_max:
                continue
            m = inst[b] == k
            c0[m] = centers[b, k - 1, 0]
            c1[m] = centers[b, k - 1, 1]
            if k < n_max:
                ref_centers[b, k] = centers[b, k - 1, ::-1]
        gt_X = c1 - row
        gt_Y = c0 - col
        mask = (inst[b] > 0).astype(np.float64)
        near = ((np.abs(gt_X) < ignore_px) & (np.abs(gt_Y) < ignore_px)).astype(np.float64)
        theta = np.arctan2(gt_Y, gt_X)
        maps[b, 0] = np.sqrt(gt_X ** 2 + gt_Y ** 2) * mask
        maps[b, 1] = theta
        maps[b, 2] = np.sin(theta) * mask
        maps[b, 3] = np.cos(theta) * mask
        maps[b, 4] = 1.0 - near
        acc = gvm @ near @ ghm
        if acc.max() > 0:
            maps[b, 5] = acc / acc.max()
    return maps.astype(np.float32), ref_centers.astype(np.float32)


if __name__ == "__main__":
    B, H, W = 2, 16, 16
    key = jax.random.PRNGKey(0)

    inst_np = np.zeros((B, 1, H, W), np.int32)
    inst_np[0, 0, 2:7, 3:9] = 1
    inst_np[0, 0, 9:14, 8:15] = 2
    inst_np[1, 0, 1:6, 1:6] = 1
    inst_np[1, 0, 8:15, 4:12] = 3

    base = np.zeros((B, MAX_NUM_CENTERS, 2), np.float32)
    base[0, 0] = (5.5, 4.0)     # centers[b, id-1] for instance 1 of image 0
    base[0, 1] = (11.0, 11.0)   # instance 2 of image 0
    base[1, 0] = (3.0, 3.0)     # instance 1 of image 1
    base[1, 2] = (7.5, 11.0)    # instance 3 of image 1
    jitter = jax.random.uniform(key, (B, MAX_NUM_CENTERS, 2), minval=-0.25, maxval=0.25)
    centers = jnp.asarray(base) + jitter * (jnp.asarray(base) > 0)

    sample = {
        'instance': jnp.asarray(inst_np),
        'label': jnp.zeros((B, 1, H, W), jnp.int32),
        'im_name': [f"img_{i}" for i in range(B)],
        'center': centers,
    }

    module = CenterDirGroundtruthPallas(MAX_NUM_CENTERS=MAX_NUM_CENTERS,
                                        center_ignore_px=CENTER_IGNORE_PX,
                                        center_gt_blur=CENTER_GT_BLUR_SIGMA)
    out_sample = module(sample, jnp.arange(B))
    centerdir_gt = out_sample['centerdir_groundtruth']

    mat = np.asarray(jax.block_until_ready(centerdir_gt[0]))
    gt_centers = np.asarray(jax.block_until_ready(centerdir_gt[2]))
    ext = np.asarray(jax.block_until_ready(centerdir_gt[4]))

    assert mat.shape == (B, 13, 1, H, W) and mat.dtype == np.float32
    assert gt_centers.shape == (B, MAX_NUM_CENTERS, 2)
    assert ext.shape == (B, H, W) and ext.dtype == np.int16
    assert np.all(np.isfinite(mat))

    ref_maps, ref_centers = _reference_maps(inst_np[:, 0], np.asarray(centers),
                                            float(CENTER_IGNORE_PX), module.g1d, module.blur_r)
    np.testing.assert_allclose(mat[:, :5, 0], ref_maps[:, :5], atol=2e-3, rtol=1e-3)
    np.testing.assert_allclose(mat[:, 5, 0], ref_maps[:, 5], atol=5e-2)   # bf16 blur tolerance
    assert np.all(mat[:, 6:13] == 0.0)
    np.testing.assert_allclose(gt_centers, ref_centers, atol=1e-5)

    print("KERNEL_OK")
</pallas_src>

<mosaic_0001>
module attributes {stable_mosaic.version = 11 : i64} {
  func.func @centerdir_kernel(%arg0: i32, %arg1: i32, %arg2: memref<2x2xi32, #tpu.memory_space<smem>>, %arg3: memref<2x2x100xf32, #tpu.memory_space<smem>>, %arg4: memref<1x16x16xi32, #tpu.memory_space<vmem>>, %arg5: memref<1x13x16x16xf32, #tpu.memory_space<vmem>>, %arg6: memref<1x1x1x128xf32, #tpu.memory_space<vmem>>) attributes {dimension_semantics = [#tpu.dimension_semantics<parallel>, #tpu.dimension_semantics<parallel>], iteration_bounds = array<i64: 2, 1>, scalar_prefetch = 1 : i64, scratch_operands = 0 : i64, tpu.core_type = #tpu.core_type<tc>, window_params = [{transform_indices = @transform_0, window_bounds = array<i64: 2, 2, 100>}, {transform_indices = @transform_1, window_bounds = array<i64: 1, 16, 16>}, {transform_indices = @transform_2, window_bounds = array<i64: 1, 13, 16, 16>}, {transform_indices = @transform_3, window_bounds = array<i64: 1, 1, 1, 128>}]} {
    %0 = arith.index_cast %arg0 : i32 to index
    %c0 = arith.constant 0 : index
    %1 = memref.load %arg2[%0, %c0] : memref<2x2xi32, #tpu.memory_space<smem>>
    %2 = arith.index_cast %arg0 : i32 to index
    %c1 = arith.constant 1 : index
    %3 = memref.load %arg2[%2, %c1] : memref<2x2xi32, #tpu.memory_space<smem>>
    %c0_i32 = arith.constant 0 : i32
    %4 = arith.cmpi sgt, %1, %c0_i32 : i32
    %5 = arith.extui %4 : i1 to i32
    %c0_i32_0 = arith.constant 0 : i32
    %6 = arith.cmpi ne, %5, %c0_i32_0 : i32
    scf.if %6 {
      %c0_3 = arith.constant 0 : index
      %c0_4 = arith.constant 0 : index
      %c0_5 = arith.constant 0 : index
      %10 = vector.load %arg4[%c0_3, %c0_4, %c0_5] : memref<1x16x16xi32, #tpu.memory_space<vmem>>, vector<1x16x16xi32>
      %11 = vector.shape_cast %10 : vector<1x16x16xi32> to vector<16x16xi32>
      %12 = tpu.iota {dimensions = array<i32: 0>} : vector<16x16xi32>
      %c16_i32 = arith.constant 16 : i32
      %13 = arith.muli %arg1, %c16_i32 : i32
      %14 = vector.broadcast %13 : i32 to vector<16x16xi32>
      %15 = arith.addi %12, %14 : vector<16x16xi32>
      %16 = arith.sitofp %15 : vector<16x16xi32> to vector<16x16xf32>
      %17 = tpu.iota {dimensions = array<i32: 1>} : vector<16x16xi32>
      %18 = arith.sitofp %17 : vector<16x16xi32> to vector<16x16xf32>
      %19 = tpu.iota {dimensions = array<i32: 1>} : vector<1x128xi32>
      %cst = arith.constant -1.000000e+04 : f32
      %20 = vector.broadcast %cst : f32 to vector<16x16xf32>
      %cst_6 = arith.constant -1.000000e+04 : f32
      %21 = vector.broadcast %cst_6 : f32 to vector<16x16xf32>
      %cst_7 = arith.constant 0.000000e+00 : f32
      %22 = vector.broadcast %cst_7 : f32 to vector<1x128xf32>
      %c0_i32_8 = arith.constant 0 : i32
      %23 = arith.subi %3, %c0_i32_8 : i32
      %24 = arith.addi %c0_i32_8, %23 : i32
      %c1_i32 = arith.constant 1 : i32
      %25:3 = scf.for %arg7 = %c0_i32_8 to %24 step %c1_i32 iter_args(%arg8 = %20, %arg9 = %21, %arg10 = %22) -> (vector<16x16xf32>, vector<16x16xf32>, vector<1x128xf32>)  : i32 {
        %c1_i32_75 = arith.constant 1 : i32
        %149 = arith.addi %arg7, %c1_i32_75 : i32
        %150 = vector.broadcast %149 : i32 to vector<16x16xi32>
        %151 = arith.cmpi eq, %11, %150 : vector<16x16xi32>
        %152 = arith.index_cast %arg0 : i32 to index
        %c0_76 = arith.constant 0 : index
        %153 = arith.index_cast %arg7 : i32 to index
        %154 = memref.load %arg3[%152, %c0_76, %153] : memref<2x2x100xf32, #tpu.memory_space<smem>>
        %155 = vector.broadcast %154 : f32 to vector<16x16xf32>
        %156 = arith.select %151, %155, %arg8 : vector<16x16xi1>, vector<16x16xf32>
        %157 = arith.index_cast %arg0 : i32 to index
        %c1_77 = arith.constant 1 : index
        %158 = arith.index_cast %arg7 : i32 to index
        %159 = memref.load %arg3[%157, %c1_77, %158] : memref<2x2x100xf32, #tpu.memory_space<smem>>
        %160 = vector.broadcast %159 : f32 to vector<16x16xf32>
        %161 = arith.select %151, %160, %arg9 : vector<16x16xi1>, vector<16x16xf32>
        %162 = arith.extui %151 : vector<16x16xi1> to vector<16x16xi32>
        %163 = arith.sitofp %162 : vector<16x16xi32> to vector<16x16xf32>
        %cst_78 = arith.constant dense<0xFF800000> : vector<16xf32>
        %164 = vector.multi_reduction <maximumf>, %163, %cst_78 [1] : vector<16x16xf32> to vector<16xf32>
        %165 = vector.shape_cast %164 : vector<16xf32> to vector<16x1xf32>
        %cst_79 = arith.constant dense<0xFF800000> : vector<1xf32>
        %166 = vector.multi_reduction <maximumf>, %165, %cst_79 [0] : vector<16x1xf32> to vector<1xf32>
        %167 = vector.shape_cast %166 : vector<1xf32> to vector<1x1xf32>
        %168 = vector.broadcast %arg7 : i32 to vector<1x128xi32>
        %169 = arith.cmpi eq, %19, %168 : vector<1x128xi32>
        %cst_80 = arith.constant 0.000000e+00 : f32
        %170 = vector.shape_cast %167 : vector<1x1xf32> to vector<1x1xf32>
        %171 = vector.broadcast %170 : vector<1x1xf32> to vector<1x128xf32>
        %172 = vector.broadcast %cst_80 : f32 to vector<1x128xf32>
        %173 = arith.select %169, %171, %172 : vector<1x128xi1>, vector<1x128xf32>
        %174 = arith.maximumf %arg10, %173 : vector<1x128xf32>
        scf.yield %156, %161, %174 : vector<16x16xf32>, vector<16x16xf32>, vector<1x128xf32>
      }
      %26 = arith.subf %25#1, %16 : vector<16x16xf32>
      %27 = arith.subf %25#0, %18 : vector<16x16xf32>
      %c0_i32_9 = arith.constant 0 : i32
      %28 = vector.broadcast %c0_i32_9 : i32 to vector<16x16xi32>
      %29 = arith.cmpi sgt, %11, %28 : vector<16x16xi32>
      %30 = arith.extui %29 : vector<16x16xi1> to vector<16x16xi32>
      %31 = arith.sitofp %30 : vector<16x16xi32> to vector<16x16xf32>
      %32 = math.absf %26 : vector<16x16xf32>
      %cst_10 = arith.constant 3.000000e+00 : f32
      %33 = vector.broadcast %cst_10 : f32 to vector<16x16xf32>
      %34 = arith.cmpf olt, %32, %33 : vector<16x16xf32>
      %35 = math.absf %27 : vector<16x16xf32>
      %cst_11 = arith.constant 3.000000e+00 : f32
      %36 = vector.broadcast %cst_11 : f32 to vector<16x16xf32>
      %37 = arith.cmpf olt, %35, %36 : vector<16x16xf32>
      %38 = arith.andi %34, %37 : vector<16x16xi1>
      %39 = arith.extui %38 : vector<16x16xi1> to vector<16x16xi32>
      %40 = arith.sitofp %39 : vector<16x16xi32> to vector<16x16xf32>
      %41 = arith.mulf %26, %26 : vector<16x16xf32>
      %42 = arith.mulf %27, %27 : vector<16x16xf32>
      %43 = arith.addf %41, %42 : vector<16x16xf32>
      %cst_12 = arith.constant 0.000000e+00 : f32
      %44 = vector.broadcast %cst_12 : f32 to vector<16x16xf32>
      %45 = arith.cmpf ogt, %43, %44 : vector<16x16xf32>
      %cst_13 = arith.constant 1.000000e+00 : f32
      %46 = vector.broadcast %cst_13 : f32 to vector<16x16xf32>
      %47 = arith.select %45, %43, %46 : vector<16x16xi1>, vector<16x16xf32>
      %48 = math.rsqrt %47 : vector<16x16xf32>
      %49 = arith.mulf %43, %48 : vector<16x16xf32>
      %50 = arith.mulf %49, %31 : vector<16x16xf32>
      %51 = arith.mulf %27, %48 : vector<16x16xf32>
      %cst_14 = arith.constant 0.000000e+00 : f32
      %52 = vector.broadcast %cst_14 : f32 to vector<16x16xf32>
      %53 = arith.select %45, %51, %52 : vector<16x16xi1>, vector<16x16xf32>
      %54 = arith.mulf %53, %31 : vector<16x16xf32>
      %55 = arith.mulf %26, %48 : vector<16x16xf32>
      %cst_15 = arith.constant 1.000000e+00 : f32
      %56 = vector.broadcast %cst_15 : f32 to vector<16x16xf32>
      %57 = arith.select %45, %55, %56 : vector<16x16xi1>, vector<16x16xf32>
      %58 = arith.mulf %57, %31 : vector<16x16xf32>
      %59 = math.absf %26 : vector<16x16xf32>
      %60 = math.absf %27 : vector<16x16xf32>
      %61 = arith.minimumf %59, %60 : vector<16x16xf32>
      %62 = arith.maximumf %59, %60 : vector<16x16xf32>
      %cst_16 = arith.constant 0.414213568 : f32
      %63 = vector.broadcast %cst_16 : f32 to vector<16x16xf32>
      %64 = arith.mulf %63, %62 : vector<16x16xf32>
      %65 = arith.cmpf ogt, %61, %64 : vector<16x16xf32>
      %66 = arith.subf %61, %62 : vector<16x16xf32>
      %67 = arith.select %65, %66, %61 : vector<16x16xi1>, vector<16x16xf32>
      %68 = arith.addf %61, %62 : vector<16x16xf32>
      %69 = arith.select %65, %68, %62 : vector<16x16xi1>, vector<16x16xf32>
      %cst_17 = arith.constant 1.000000e-30 : f32
      %70 = vector.broadcast %cst_17 : f32 to vector<16x16xf32>
      %71 = arith.maximumf %69, %70 : vector<16x16xf32>
      %72 = arith.divf %67, %71 : vector<16x16xf32>
      %73 = arith.mulf %72, %72 : vector<16x16xf32>
      %cst_18 = arith.constant 0.0805374458 : f32
      %74 = vector.broadcast %cst_18 : f32 to vector<16x16xf32>
      %75 = arith.mulf %74, %73 : vector<16x16xf32>
      %cst_19 = arith.constant 0.138776854 : f32
      %76 = vector.broadcast %cst_19 : f32 to vector<16x16xf32>
      %77 = arith.subf %75, %76 : vector<16x16xf32>
      %78 = arith.mulf %77, %73 : vector<16x16xf32>
      %cst_20 = arith.constant 0.199777111 : f32
      %79 = vector.broadcast %cst_20 : f32 to vector<16x16xf32>
      %80 = arith.addf %78, %79 : vector<16x16xf32>
      %81 = arith.mulf %80, %73 : vector<16x16xf32>
      %cst_21 = arith.constant 0.333329499 : f32
      %82 = vector.broadcast %cst_21 : f32 to vector<16x16xf32>
      %83 = arith.subf %81, %82 : vector<16x16xf32>
      %84 = arith.mulf %83, %73 : vector<16x16xf32>
      %85 = arith.mulf %84, %72 : vector<16x16xf32>
      %86 = arith.addf %85, %72 : vector<16x16xf32>
      %cst_22 = arith.constant 0.785398185 : f32
      %87 = vector.broadcast %cst_22 : f32 to vector<16x16xf32>
      %88 = arith.addf %86, %87 : vector<16x16xf32>
      %89 = arith.select %65, %88, %86 : vector<16x16xi1>, vector<16x16xf32>
      %90 = arith.cmpf ogt, %60, %59 : vector<16x16xf32>
      %cst_23 = arith.constant 1.57079637 : f32
      %91 = vector.broadcast %cst_23 : f32 to vector<16x16xf32>
      %92 = arith.subf %91, %89 : vector<16x16xf32>
      %93 = arith.select %90, %92, %89 : vector<16x16xi1>, vector<16x16xf32>
      %cst_24 = arith.constant 0.000000e+00 : f32
      %94 = vector.broadcast %cst_24 : f32 to vector<16x16xf32>
      %95 = arith.cmpf olt, %26, %94 : vector<16x16xf32>
      %cst_25 = arith.constant 3.14159274 : f32
      %96 = vector.broadcast %cst_25 : f32 to vector<16x16xf32>
      %97 = arith.subf %96, %93 : vector<16x16xf32>
      %98 = arith.select %95, %97, %93 : vector<16x16xi1>, vector<16x16xf32>
      %cst_26 = arith.constant 0.000000e+00 : f32
      %99 = vector.broadcast %cst_26 : f32 to vector<16x16xf32>
      %100 = arith.cmpf olt, %27, %99 : vector<16x16xf32>
      %cst_27 = arith.constant 0.000000e+00 : f32
      %101 = vector.broadcast %cst_27 : f32 to vector<16x16xf32>
      %102 = arith.subf %101, %98 : vector<16x16xf32>
      %103 = arith.select %100, %102, %98 : vector<16x16xi1>, vector<16x16xf32>
      %cst_28 = arith.constant 0.000000e+00 : f32
      %104 = vector.broadcast %cst_28 : f32 to vector<16x16xf32>
      %c0_29 = arith.constant 0 : index
      %c0_30 = arith.constant 0 : index
      %c0_31 = arith.constant 0 : index
      %c0_32 = arith.constant 0 : index
      %105 = vector.load %arg5[%c0_29, %c0_30, %c0_31, %c0_32] : memref<1x13x16x16xf32, #tpu.memory_space<vmem>>, vector<1x1x16x16xf32>
      %106 = vector.shape_cast %105 : vector<1x1x16x16xf32> to vector<16x16xf32>
      %107 = vector.shape_cast %50 : vector<16x16xf32> to vector<1x1x16x16xf32>
      tpu.vector_store %arg5[%c0_29, %c0_30, %c0_31, %c0_32], %107 {strides = array<i32>} : memref<1x13x16x16xf32, #tpu.memory_space<vmem>>, vector<1x1x16x16xf32>,
      %c0_33 = arith.constant 0 : index
      %c1_34 = arith.constant 1 : index
      %c0_35 = arith.constant 0 : index
      %c0_36 = arith.constant 0 : index
      %108 = vector.load %arg5[%c0_33, %c1_34, %c0_35, %c0_36] : memref<1x13x16x16xf32, #tpu.memory_space<vmem>>, vector<1x1x16x16xf32>
      %109 = vector.shape_cast %108 : vector<1x1x16x16xf32> to vector<16x16xf32>
      %110 = vector.shape_cast %103 : vector<16x16xf32> to vector<1x1x16x16xf32>
      tpu.vector_store %arg5[%c0_33, %c1_34, %c0_35, %c0_36], %110 {strides = array<i32>} : memref<1x13x16x16xf32, #tpu.memory_space<vmem>>, vector<1x1x16x16xf32>,
      %c0_37 = arith.constant 0 : index
      %c2 = arith.constant 2 : index
      %c0_38 = arith.constant 0 : index
      %c0_39 = arith.constant 0 : index
      %111 = vector.load %arg5[%c0_37, %c2, %c0_38, %c0_39] : memref<1x13x16x16xf32, #tpu.memory_space<vmem>>, vector<1x1x16x16xf32>
      %112 = vector.shape_cast %111 : vector<1x1x16x16xf32> to vector<16x16xf32>
      %113 = vector.shape_cast %54 : vector<16x16xf32> to vector<1x1x16x16xf32>
      tpu.vector_store %arg5[%c0_37, %c2, %c0_38, %c0_39], %113 {strides = array<i32>} : memref<1x13x16x16xf32, #tpu.memory_space<vmem>>, vector<1x1x16x16xf32>,
      %c0_40 = arith.constant 0 : index
      %c3 = arith.constant 3 : index
      %c0_41 = arith.constant 0 : index
      %c0_42 = arith.constant 0 : index
      %114 = vector.load %arg5[%c0_40, %c3, %c0_41, %c0_42] : memref<1x13x16x16xf32, #tpu.memory_space<vmem>>, vector<1x1x16x16xf32>
      %115 = vector.shape_cast %114 : vector<1x1x16x16xf32> to vector<16x16xf32>
      %116 = vector.shape_cast %58 : vector<16x16xf32> to vector<1x1x16x16xf32>
      tpu.vector_store %arg5[%c0_40, %c3, %c0_41, %c0_42], %116 {strides = array<i32>} : memref<1x13x16x16xf32, #tpu.memory_space<vmem>>, vector<1x1x16x16xf32>,
      %cst_43 = arith.constant 1.000000e+00 : f32
      %117 = vector.broadcast %cst_43 : f32 to vector<16x16xf32>
      %118 = arith.subf %117, %40 : vector<16x16xf32>
      %c0_44 = arith.constant 0 : index
      %c4 = arith.constant 4 : index
      %c0_45 = arith.constant 0 : index
      %c0_46 = arith.constant 0 : index
      %119 = vector.load %arg5[%c0_44, %c4, %c0_45, %c0_46] : memref<1x13x16x16xf32, #tpu.memory_space<vmem>>, vector<1x1x16x16xf32>
      %120 = vector.shape_cast %119 : vector<1x1x16x16xf32> to vector<16x16xf32>
      %121 = vector.shape_cast %118 : vector<16x16xf32> to vector<1x1x16x16xf32>
      tpu.vector_store %arg5[%c0_44, %c4, %c0_45, %c0_46], %121 {strides = array<i32>} : memref<1x13x16x16xf32, #tpu.memory_space<vmem>>, vector<1x1x16x16xf32>,
      %c0_47 = arith.constant 0 : index
      %c5 = arith.constant 5 : index
      %c0_48 = arith.constant 0 : index
      %c0_49 = arith.constant 0 : index
      %122 = vector.load %arg5[%c0_47, %c5, %c0_48, %c0_49] : memref<1x13x16x16xf32, #tpu.memory_space<vmem>>, vector<1x1x16x16xf32>
      %123 = vector.shape_cast %122 : vector<1x1x16x16xf32> to vector<16x16xf32>
      %124 = vector.shape_cast %40 : vector<16x16xf32> to vector<1x1x16x16xf32>
      tpu.vector_store %arg5[%c0_47, %c5, %c0_48, %c0_49], %124 {strides = array<i32>} : memref<1x13x16x16xf32, #tpu.memory_space<vmem>>, vector<1x1x16x16xf32>,
      %c0_50 = arith.constant 0 : index
      %c6 = arith.constant 6 : index
      %c0_51 = arith.constant 0 : index
      %c0_52 = arith.constant 0 : index
      %125 = vector.load %arg5[%c0_50, %c6, %c0_51, %c0_52] : memref<1x13x16x16xf32, #tpu.memory_space<vmem>>, vector<1x1x16x16xf32>
      %126 = vector.shape_cast %125 : vector<1x1x16x16xf32> to vector<16x16xf32>
      %127 = vector.shape_cast %104 : vector<16x16xf32> to vector<1x1x16x16xf32>
      tpu.vector_store %arg5[%c0_50, %c6, %c0_51, %c0_52], %127 {strides = array<i32>} : memref<1x13x16x16xf32, #tpu.memory_space<vmem>>, vector<1x1x16x16xf32>,
      %c0_53 = arith.constant 0 : index
      %c7 = arith.constant 7 : index
      %c0_54 = arith.constant 0 : index
      %c0_55 = arith.constant 0 : index
      %128 = vector.load %arg5[%c0_53, %c7, %c0_54, %c0_55] : memref<1x13x16x16xf32, #tpu.memory_space<vmem>>, vector<1x1x16x16xf32>
      %129 = vector.shape_cast %128 : vector<1x1x16x16xf32> to vector<16x16xf32>
      %130 = vector.shape_cast %104 : vector<16x16xf32> to vector<1x1x16x16xf32>
      tpu.vector_store %arg5[%c0_53, %c7, %c0_54, %c0_55], %130 {strides = array<i32>} : memref<1x13x16x16xf32, #tpu.memory_space<vmem>>, vector<1x1x16x16xf32>,
      %c0_56 = arith.constant 0 : index
      %c8 = arith.constant 8 : index
      %c0_57 = arith.constant 0 : index
      %c0_58 = arith.constant 0 : index
      %131 = vector.load %arg5[%c0_56, %c8, %c0_57, %c0_58] : memref<1x13x16x16xf32, #tpu.memory_space<vmem>>, vector<1x1x16x16xf32>
      %132 = vector.shape_cast %131 : vector<1x1x16x16xf32> to vector<16x16xf32>
      %133 = vector.shape_cast %104 : vector<16x16xf32> to vector<1x1x16x16xf32>
      tpu.vector_store %arg5[%c0_56, %c8, %c0_57, %c0_58], %133 {strides = array<i32>} : memref<1x13x16x16xf32, #tpu.memory_space<vmem>>, vector<1x1x16x16xf32>,
      %c0_59 = arith.constant 0 : index
      %c9 = arith.constant 9 : index
      %c0_60 = arith.constant 0 : index
      %c0_61 = arith.constant 0 : index
      %134 = vector.load %arg5[%c0_59, %c9, %c0_60, %c0_61] : memref<1x13x16x16xf32, #tpu.memory_space<vmem>>, vector<1x1x16x16xf32>
      %135 = vector.shape_cast %134 : vector<1x1x16x16xf32> to vector<16x16xf32>
      %136 = vector.shape_cast %104 : vector<16x16xf32> to vector<1x1x16x16xf32>
      tpu.vector_store %arg5[%c0_59, %c9, %c0_60, %c0_61], %136 {strides = array<i32>} : memref<1x13x16x16xf32, #tpu.memory_space<vmem>>, vector<1x1x16x16xf32>,
      %c0_62 = arith.constant 0 : index
      %c10 = arith.constant 10 : index
      %c0_63 = arith.constant 0 : index
      %c0_64 = arith.constant 0 : index
      %137 = vector.load %arg5[%c0_62, %c10, %c0_63, %c0_64] : memref<1x13x16x16xf32, #tpu.memory_space<vmem>>, vector<1x1x16x16xf32>
      %138 = vector.shape_cast %137 : vector<1x1x16x16xf32> to vector<16x16xf32>
      %139 = vector.shape_cast %104 : vector<16x16xf32> to vector<1x1x16x16xf32>
      tpu.vector_store %arg5[%c0_62, %c10, %c0_63, %c0_64], %139 {strides = array<i32>} : memref<1x13x16x16xf32, #tpu.memory_space<vmem>>, vector<1x1x16x16xf32>,
      %c0_65 = arith.constant 0 : index
      %c11 = arith.constant 11 : index
      %c0_66 = arith.constant 0 : index
      %c0_67 = arith.constant 0 : index
      %140 = vector.load %arg5[%c0_65, %c11, %c0_66, %c0_67] : memref<1x13x16x16xf32, #tpu.memory_space<vmem>>, vector<1x1x16x16xf32>
      %141 = vector.shape_cast %140 : vector<1x1x16x16xf32> to vector<16x16xf32>
      %142 = vector.shape_cast %104 : vector<16x16xf32> to vector<1x1x16x16xf32>
      tpu.vector_store %arg5[%c0_65, %c11, %c0_66, %c0_67], %142 {strides = array<i32>} : memref<1x13x16x16xf32, #tpu.memory_space<vmem>>, vector<1x1x16x16xf32>,
      %c0_68 = arith.constant 0 : index
      %c12 = arith.constant 12 : index
      %c0_69 = arith.constant 0 : index
      %c0_70 = arith.constant 0 : index
      %143 = vector.load %arg5[%c0_68, %c12, %c0_69, %c0_70] : memref<1x13x16x16xf32, #tpu.memory_space<vmem>>, vector<1x1x16x16xf32>
      %144 = vector.shape_cast %143 : vector<1x1x16x16xf32> to vector<16x16xf32>
      %145 = vector.shape_cast %104 : vector<16x16xf32> to vector<1x1x16x16xf32>
      tpu.vector_store %arg5[%c0_68, %c12, %c0_69, %c0_70], %145 {strides = array<i32>} : memref<1x13x16x16xf32, #tpu.memory_space<vmem>>, vector<1x1x16x16xf32>,
      %c0_71 = arith.constant 0 : index
      %c0_72 = arith.constant 0 : index
      %c0_73 = arith.constant 0 : index
      %c0_74 = arith.constant 0 : index
      %146 = vector.load %arg6[%c0_71, %c0_72, %c0_73, %c0_74] : memref<1x1x1x128xf32, #tpu.memory_space<vmem>>, vector<1x1x1x128xf32>
      %147 = vector.shape_cast %146 : vector<1x1x1x128xf32> to vector<1x128xf32>
      %148 = vector.shape_cast %25#2 : vector<1x128xf32> to vector<1x1x1x128xf32>
      tpu.vector_store %arg6[%c0_71, %c0_72, %c0_73, %c0_74], %148 {strides = array<i32>} : memref<1x1x1x128xf32, #tpu.memory_space<vmem>>, vector<1x1x1x128xf32>,
    } else {
    }
    %c0_i32_1 = arith.constant 0 : i32
    %7 = arith.cmpi eq, %1, %c0_i32_1 : i32
    %8 = arith.extui %7 : i1 to i32
    %c0_i32_2 = arith.constant 0 : i32
    %9 = arith.cmpi ne, %8, %c0_i32_2 : i32
    scf.if %9 {
      %cst = arith.constant 0.000000e+00 : f32
      %10 = vector.broadcast %cst : f32 to vector<16x16xf32>
      %c0_3 = arith.constant 0 : index
      %c0_4 = arith.constant 0 : index
      %c0_5 = arith.constant 0 : index
      %c0_6 = arith.constant 0 : index
      %11 = vector.load %arg5[%c0_3, %c0_4, %c0_5, %c0_6] : memref<1x13x16x16xf32, #tpu.memory_space<vmem>>, vector<1x1x16x16xf32>
      %12 = vector.shape_cast %11 : vector<1x1x16x16xf32> to vector<16x16xf32>
      %13 = vector.shape_cast %10 : vector<16x16xf32> to vector<1x1x16x16xf32>
      tpu.vector_store %arg5[%c0_3, %c0_4, %c0_5, %c0_6], %13 {strides = array<i32>} : memref<1x13x16x16xf32, #tpu.memory_space<vmem>>, vector<1x1x16x16xf32>,
      %c0_7 = arith.constant 0 : index
      %c1_8 = arith.constant 1 : index
      %c0_9 = arith.constant 0 : index
      %c0_10 = arith.constant 0 : index
      %14 = vector.load %arg5[%c0_7, %c1_8, %c0_9, %c0_10] : memref<1x13x16x16xf32, #tpu.memory_space<vmem>>, vector<1x1x16x16xf32>
      %15 = vector.shape_cast %14 : vector<1x1x16x16xf32> to vector<16x16xf32>
      %16 = vector.shape_cast %10 : vector<16x16xf32> to vector<1x1x16x16xf32>
      tpu.vector_store %arg5[%c0_7, %c1_8, %c0_9, %c0_10], %16 {strides = array<i32>} : memref<1x13x16x16xf32, #tpu.memory_space<vmem>>, vector<1x1x16x16xf32>,
      %c0_11 = arith.constant 0 : index
      %c2 = arith.constant 2 : index
      %c0_12 = arith.constant 0 : index
      %c0_13 = arith.constant 0 : index
      %17 = vector.load %arg5[%c0_11, %c2, %c0_12, %c0_13] : memref<1x13x16x16xf32, #tpu.memory_space<vmem>>, vector<1x1x16x16xf32>
      %18 = vector.shape_cast %17 : vector<1x1x16x16xf32> to vector<16x16xf32>
      %19 = vector.shape_cast %10 : vector<16x16xf32> to vector<1x1x16x16xf32>
      tpu.vector_store %arg5[%c0_11, %c2, %c0_12, %c0_13], %19 {strides = array<i32>} : memref<1x13x16x16xf32, #tpu.memory_space<vmem>>, vector<1x1x16x16xf32>,
      %c0_14 = arith.constant 0 : index
      %c3 = arith.constant 3 : index
      %c0_15 = arith.constant 0 : index
      %c0_16 = arith.constant 0 : index
      %20 = vector.load %arg5[%c0_14, %c3, %c0_15, %c0_16] : memref<1x13x16x16xf32, #tpu.memory_space<vmem>>, vector<1x1x16x16xf32>
      %21 = vector.shape_cast %20 : vector<1x1x16x16xf32> to vector<16x16xf32>
      %22 = vector.shape_cast %10 : vector<16x16xf32> to vector<1x1x16x16xf32>
      tpu.vector_store %arg5[%c0_14, %c3, %c0_15, %c0_16], %22 {strides = array<i32>} : memref<1x13x16x16xf32, #tpu.memory_space<vmem>>, vector<1x1x16x16xf32>,
      %cst_17 = arith.constant 1.000000e+00 : f32
      %23 = vector.broadcast %cst_17 : f32 to vector<16x16xf32>
      %c0_18 = arith.constant 0 : index
      %c4 = arith.constant 4 : index
      %c0_19 = arith.constant 0 : index
      %c0_20 = arith.constant 0 : index
      %24 = vector.load %arg5[%c0_18, %c4, %c0_19, %c0_20] : memref<1x13x16x16xf32, #tpu.memory_space<vmem>>, vector<1x1x16x16xf32>
      %25 = vector.shape_cast %24 : vector<1x1x16x16xf32> to vector<16x16xf32>
      %26 = vector.shape_cast %23 : vector<16x16xf32> to vector<1x1x16x16xf32>
      tpu.vector_store %arg5[%c0_18, %c4, %c0_19, %c0_20], %26 {strides = array<i32>} : memref<1x13x16x16xf32, #tpu.memory_space<vmem>>, vector<1x1x16x16xf32>,
      %c0_21 = arith.constant 0 : index
      %c5 = arith.constant 5 : index
      %c0_22 = arith.constant 0 : index
      %c0_23 = arith.constant 0 : index
      %27 = vector.load %arg5[%c0_21, %c5, %c0_22, %c0_23] : memref<1x13x16x16xf32, #tpu.memory_space<vmem>>, vector<1x1x16x16xf32>
      %28 = vector.shape_cast %27 : vector<1x1x16x16xf32> to vector<16x16xf32>
      %29 = vector.shape_cast %10 : vector<16x16xf32> to vector<1x1x16x16xf32>
      tpu.vector_store %arg5[%c0_21, %c5, %c0_22, %c0_23], %29 {strides = array<i32>} : memref<1x13x16x16xf32, #tpu.memory_space<vmem>>, vector<1x1x16x16xf32>,
      %c0_24 = arith.constant 0 : index
      %c6 = arith.constant 6 : index
      %c0_25 = arith.constant 0 : index
      %c0_26 = arith.constant 0 : index
      %30 = vector.load %arg5[%c0_24, %c6, %c0_25, %c0_26] : memref<1x13x16x16xf32, #tpu.memory_space<vmem>>, vector<1x1x16x16xf32>
      %31 = vector.shape_cast %30 : vector<1x1x16x16xf32> to vector<16x16xf32>
      %32 = vector.shape_cast %10 : vector<16x16xf32> to vector<1x1x16x16xf32>
      tpu.vector_store %arg5[%c0_24, %c6, %c0_25, %c0_26], %32 {strides = array<i32>} : memref<1x13x16x16xf32, #tpu.memory_space<vmem>>, vector<1x1x16x16xf32>,
      %c0_27 = arith.constant 0 : index
      %c7 = arith.constant 7 : index
      %c0_28 = arith.constant 0 : index
      %c0_29 = arith.constant 0 : index
      %33 = vector.load %arg5[%c0_27, %c7, %c0_28, %c0_29] : memref<1x13x16x16xf32, #tpu.memory_space<vmem>>, vector<1x1x16x16xf32>
      %34 = vector.shape_cast %33 : vector<1x1x16x16xf32> to vector<16x16xf32>
      %35 = vector.shape_cast %10 : vector<16x16xf32> to vector<1x1x16x16xf32>
      tpu.vector_store %arg5[%c0_27, %c7, %c0_28, %c0_29], %35 {strides = array<i32>} : memref<1x13x16x16xf32, #tpu.memory_space<vmem>>, vector<1x1x16x16xf32>,
      %c0_30 = arith.constant 0 : index
      %c8 = arith.constant 8 : index
      %c0_31 = arith.constant 0 : index
      %c0_32 = arith.constant 0 : index
      %36 = vector.load %arg5[%c0_30, %c8, %c0_31, %c0_32] : memref<1x13x16x16xf32, #tpu.memory_space<vmem>>, vector<1x1x16x16xf32>
      %37 = vector.shape_cast %36 : vector<1x1x16x16xf32> to vector<16x16xf32>
      %38 = vector.shape_cast %10 : vector<16x16xf32> to vector<1x1x16x16xf32>
      tpu.vector_store %arg5[%c0_30, %c8, %c0_31, %c0_32], %38 {strides = array<i32>} : memref<1x13x16x16xf32, #tpu.memory_space<vmem>>, vector<1x1x16x16xf32>,
      %c0_33 = arith.constant 0 : index
      %c9 = arith.constant 9 : index
      %c0_34 = arith.constant 0 : index
      %c0_35 = arith.constant 0 : index
      %39 = vector.load %arg5[%c0_33, %c9, %c0_34, %c0_35] : memref<1x13x16x16xf32, #tpu.memory_space<vmem>>, vector<1x1x16x16xf32>
      %40 = vector.shape_cast %39 : vector<1x1x16x16xf32> to vector<16x16xf32>
      %41 = vector.shape_cast %10 : vector<16x16xf32> to vector<1x1x16x16xf32>
      tpu.vector_store %arg5[%c0_33, %c9, %c0_34, %c0_35], %41 {strides = array<i32>} : memref<1x13x16x16xf32, #tpu.memory_space<vmem>>, vector<1x1x16x16xf32>,
      %c0_36 = arith.constant 0 : index
      %c10 = arith.constant 10 : index
      %c0_37 = arith.constant 0 : index
      %c0_38 = arith.constant 0 : index
      %42 = vector.load %arg5[%c0_36, %c10, %c0_37, %c0_38] : memref<1x13x16x16xf32, #tpu.memory_space<vmem>>, vector<1x1x16x16xf32>
      %43 = vector.shape_cast %42 : vector<1x1x16x16xf32> to vector<16x16xf32>
      %44 = vector.shape_cast %10 : vector<16x16xf32> to vector<1x1x16x16xf32>
      tpu.vector_store %arg5[%c0_36, %c10, %c0_37, %c0_38], %44 {strides = array<i32>} : memref<1x13x16x16xf32, #tpu.memory_space<vmem>>, vector<1x1x16x16xf32>,
      %c0_39 = arith.constant 0 : index
      %c11 = arith.constant 11 : index
      %c0_40 = arith.constant 0 : index
      %c0_41 = arith.constant 0 : index
      %45 = vector.load %arg5[%c0_39, %c11, %c0_40, %c0_41] : memref<1x13x16x16xf32, #tpu.memory_space<vmem>>, vector<1x1x16x16xf32>
      %46 = vector.shape_cast %45 : vector<1x1x16x16xf32> to vector<16x16xf32>
      %47 = vector.shape_cast %10 : vector<16x16xf32> to vector<1x1x16x16xf32>
      tpu.vector_store %arg5[%c0_39, %c11, %c0_40, %c0_41], %47 {strides = array<i32>} : memref<1x13x16x16xf32, #tpu.memory_space<vmem>>, vector<1x1x16x16xf32>,
      %c0_42 = arith.constant 0 : index
      %c12 = arith.constant 12 : index
      %c0_43 = arith.constant 0 : index
      %c0_44 = arith.constant 0 : index
      %48 = vector.load %arg5[%c0_42, %c12, %c0_43, %c0_44] : memref<1x13x16x16xf32, #tpu.memory_space<vmem>>, vector<1x1x16x16xf32>
      %49 = vector.shape_cast %48 : vector<1x1x16x16xf32> to vector<16x16xf32>
      %50 = vector.shape_cast %10 : vector<16x16xf32> to vector<1x1x16x16xf32>
      tpu.vector_store %arg5[%c0_42, %c12, %c0_43, %c0_44], %50 {strides = array<i32>} : memref<1x13x16x16xf32, #tpu.memory_space<vmem>>, vector<1x1x16x16xf32>,
      %cst_45 = arith.constant 0.000000e+00 : f32
      %51 = vector.broadcast %cst_45 : f32 to vector<1x1x1x128xf32>
      %c0_46 = arith.constant 0 : index
      %c0_47 = arith.constant 0 : index
      %c0_48 = arith.constant 0 : index
      %c0_49 = arith.constant 0 : index
      %52 = vector.load %arg6[%c0_46, %c0_47, %c0_48, %c0_49] : memref<1x1x1x128xf32, #tpu.memory_space<vmem>>, vector<1x1x1x128xf32>
      tpu.vector_store %arg6[%c0_46, %c0_47, %c0_48, %c0_49], %51 {strides = array<i32>} : memref<1x1x1x128xf32, #tpu.memory_space<vmem>>, vector<1x1x1x128xf32>,
    } else {
    }
    return
  }
  func.func @transform_0(%arg0: i32, %arg1: i32, %arg2: memref<2x2xi32, #tpu.memory_space<smem>>) -> (i32, i32, i32) {
    %c0_i32 = arith.constant 0 : i32
    %c0_i32_0 = arith.constant 0 : i32
    %c0_i32_1 = arith.constant 0 : i32
    %c0_i32_2 = arith.constant 0 : i32
    return %c0_i32, %c0_i32_0, %c0_i32_1 : i32, i32, i32
  }
  func.func @transform_1(%arg0: i32, %arg1: i32, %arg2: memref<2x2xi32, #tpu.memory_space<smem>>) -> (i32, i32, i32) {
    %c0_i32 = arith.constant 0 : i32
    %c0_i32_0 = arith.constant 0 : i32
    return %arg0, %arg1, %c0_i32 : i32, i32, i32
  }
  func.func @transform_2(%arg0: i32, %arg1: i32, %arg2: memref<2x2xi32, #tpu.memory_space<smem>>) -> (i32, i32, i32, i32) {
    %c0_i32 = arith.constant 0 : i32
    %c0_i32_0 = arith.constant 0 : i32
    %c0_i32_1 = arith.constant 0 : i32
    return %arg0, %c0_i32, %arg1, %c0_i32_0 : i32, i32, i32, i32
  }
  func.func @transform_3(%arg0: i32, %arg1: i32, %arg2: memref<2x2xi32, #tpu.memory_space<smem>>) -> (i32, i32, i32, i32) {
    %c0_i32 = arith.constant 0 : i32
    %c0_i32_0 = arith.constant 0 : i32
    %c0_i32_1 = arith.constant 0 : i32
    return %arg0, %arg1, %c0_i32, %c0_i32_0 : i32, i32, i32, i32
  }
}

</mosaic_0001>

<llo_original>
// kernel: tpu_custom_call.1
$region0: #{tpu_custom_call.1}
  #allocation0 [shape = 'u32[]', space=smem, size = 0x4, offset = 0x4, fixed_abs, tag = 'smem constant byte address 0x4 - core index']
  #allocation1 [shape = 'u32[144,128]{1,0:T(1,128)}', space=vmem, size = 0x12000, scoped, tag = 'internal scratch']
  #allocation2 [shape = 's32[1]{0}', space=sflag, size = 0x4, scoped, tag = 'scoped memory for tpu_custom_call.1']
  #allocation3 [shape = 'u8[1024]{0}', space=smem, size = 0x400, scoped, tag = 'prefetched SMEM operand 0']
  %s0 = inlined_call_operand.hbm [shape: s32[2,2], index: 0, kind: input, shape index: {}]
  %s1 = inlined_call_operand.hbm [shape: f32[2,2,100], index: 1, kind: input, shape index: {}]
  %s2 = inlined_call_operand.hbm [shape: s32[2,16,16], index: 2, kind: input, shape index: {}]
  %s3 = inlined_call_operand.hbm [shape: f32[2,13,16,16], index: 3, kind: output, shape index: {0}]
  %s4 = inlined_call_operand.hbm [shape: f32[2,1,1,128], index: 4, kind: output, shape index: {1}]
  %5 = xla_tuple %s3, %s4
  %s6 = sld [smem:[#allocation0]]
  $region72: #{tpu_custom_call.1} parent=0
    _
  %s8 = ssub.s32 1, %s6
  %s9 = scalar_select 0, %s8, %s6
  %11 = dma.hbm_to_smem %s0, 32, [#allocation3], [#allocation2]
  %12 = dma.done [#allocation2], 32
  %13 = sfence
  $region1: #{tpu_custom_call.1} parent=0
    #allocation4 [shape = 'u8[2048]{0}', space=smem, size = 0x800, scoped, tag = 'input window, operand 1, single buffered']
    #allocation5 [shape = 's32[2]{0}', space=sflag, size = 0x8, scoped, tag = 'scoped memory for tpu_custom_call.1']
    #allocation6 [shape = 's32[2]{0}', space=sflag, size = 0x8, scoped, tag = 'scoped memory for tpu_custom_call.1']
    #allocation7 [shape = 's32[2]{0}', space=sflag, size = 0x8, scoped, tag = 'scoped memory for tpu_custom_call.1']
    #allocation8 [shape = 'u8[16384]{0}', space=vmem, size = 0x4000, scoped, tag = 'input window, operand 2']
    #allocation9 [shape = 'u8[212992]{0}', space=vmem, size = 0x34000, scoped, tag = 'output window, operand 0']
    #allocation10 [shape = 'u8[1024]{0}', space=vmem, size = 0x400, scoped, tag = 'output window, operand 1']
    #allocation11 [shape = 's32[2]{0}', space=sflag, size = 0x8, scoped, tag = 'scoped memory for tpu_custom_call.1']
    %14 = vsyncpa [#allocation7], 0
    %15 = vsyncpa [#allocation5], 0
    %s16 = scalar_lea.sflag [#allocation5], 1
    %17 = vsyncpa %s16, 0
    %18 = vsyncpa [#allocation6], 0
    %s19 = scalar_lea.sflag [#allocation6], 1
    %20 = vsyncpa %s19, 0
    %21 = vsyncpa [#allocation11], 0
    %s22 = scalar_lea.sflag [#allocation11], 1
    %23 = vsyncpa %s22, 0
    loop: start=0, step=1, limit=4
    $region2: #{tpu_custom_call.1} parent=1 // loop_pre_header
      _
    $region3: #{tpu_custom_call.1} parent=1 // loop_header
      %s25 = sphi 0, %s29
      %p26 = scmp.ge.s32.totalorder %s25, 4
      %s32 = sphi 0, %s44
      %s33 = sphi 0, %s40
      %s34 = sphi 0, %s32
      %s35 = sphi 0, %s33
      %s36 = sphi 0, %s34
      %s37 = sphi 0, %s35
      %s45 = sphi 0, %s45
      %s47 = sphi 0, %s45
      %s48 = sphi 0, %s47
      %s62 = sphi 0, %s48
      %s70 = sphi 0, %s72
      %s73 = sphi 0, %s70
      %s74 = sphi 0, %s73
      %s90 = sphi 0, %s74
      %s98 = sphi 0, %s100
      %s101 = sphi 0, %s98
      %s102 = sphi 0, %s101
      %s118 = sphi 0, %s102
      %s126 = sphi 0, %s128
      %s129 = sphi 0, %s126
      %s130 = sphi 0, %s129
      %s146 = sphi 0, %s130
    $region4: #{tpu_custom_call.1} parent=1 // loop_header_branch
      %28 = sbr.rel (%p26) target = $region8
    $region5: #{tpu_custom_call.1} parent=1 // loop_body
      %s30 = ssub.s32 %s25, 1
      %s31 = ssub.s32 %s25, 2
      %s38 = sadd.s32 1, %s33
      %p39 = scmp.ge.s32.totalorder %s38, 1
      %s40 = scalar_select %p39, 0, %s38
      %s41 = sadd.s32 1, %s32
      %s42 = scalar_select %p39, %s41, %s32
      %p43 = scmp.ge.s32.totalorder %s42, 2
      %s44 = scalar_select %p43, 0, %s42
      %s46 = sadd.s32 %s45, 1
      %p49 = scmp.eq.s32.totalorder %s25, 1
      %p50 = scmp.ne.s32.totalorder %s45, %s47
      %p51 = scmp.eq.s32.totalorder %s25, 0
      %p52 = por %p50, %p51
      %p53 = scmp.ne.s32.totalorder %s45, %s47
      %p54 = scmp.eq.s32.totalorder %s30, 1
      %p55 = por %p53, %p54
      %p56 = scmp.ne.s32.totalorder %s47, %s48
      %p57 = scmp.eq.s32.totalorder %s30, 0
      %p58 = por %p56, %p57
      %p59 = scmp.ne.s32.totalorder %s47, %s48
      %p60 = scmp.eq.s32.totalorder %s31, 1
      %p61 = por %p59, %p60
      %p63 = scmp.ne.s32.totalorder %s48, %s62
      %p64 = scmp.eq.s32.totalorder %s31, 0
      %p65 = por %p63, %p64
      %s66 = ssub.s32 %s32, %s44
      %s67 = ssub.s32 %s33, %s40
      %s68 = sor.u32 %s66, %s67
      %p69 = scmp.eq.s32.totalorder %s68, 0
      %s71 = sadd.s32 %s70, 1
      %s72 = scalar_select %p69, %s70, %s71
      %p75 = pneg %p69
      %p76 = scmp.eq.s32.totalorder %s25, 1
      %p77 = por %p75, %p76
      %p78 = scmp.ne.s32.totalorder %s70, %s73
      %p79 = scmp.eq.s32.totalorder %s25, 0
      %p80 = por %p78, %p79
      %p81 = scmp.ne.s32.totalorder %s70, %s73
      %p82 = scmp.eq.s32.totalorder %s30, 1
      %p83 = por %p81, %p82
      %p84 = scmp.ne.s32.totalorder %s73, %s74
      %p85 = scmp.eq.s32.totalorder %s30, 0
      %p86 = por %p84, %p85
      %p87 = scmp.ne.s32.totalorder %s73, %s74
      %p88 = scmp.eq.s32.totalorder %s31, 1
      %p89 = por %p87, %p88
      %p91 = scmp.ne.s32.totalorder %s74, %s90
      %p92 = scmp.eq.s32.totalorder %s31, 0
      %p93 = por %p91, %p92
      %s94 = ssub.s32 %s32, %s44
      %s95 = ssub.s32 %s33, %s40
      %s96 = sor.u32 %s94, %s95
      %p97 = scmp.eq.s32.totalorder %s96, 0
      %s99 = sadd.s32 %s98, 1
      %s100 = scalar_select %p97, %s98, %s99
      %p103 = pneg %p97
      %p104 = scmp.eq.s32.totalorder %s25, 1
      %p105 = por %p103, %p104
      %p106 = scmp.ne.s32.totalorder %s98, %s101
      %p107 = scmp.eq.s32.totalorder %s25, 0
      %p108 = por %p106, %p107
      %p109 = scmp.ne.s32.totalorder %s98, %s101
      %p110 = scmp.eq.s32.totalorder %s30, 1
      %p111 = por %p109, %p110
      %p112 = scmp.ne.s32.totalorder %s101, %s102
      %p113 = scmp.eq.s32.totalorder %s30, 0
      %p114 = por %p112, %p113
      %p115 = scmp.ne.s32.totalorder %s101, %s102
      %p116 = scmp.eq.s32.totalorder %s31, 1
      %p117 = por %p115, %p116
      %p119 = scmp.ne.s32.totalorder %s102, %s118
      %p120 = scmp.eq.s32.totalorder %s31, 0
      %p121 = por %p119, %p120
      %s122 = ssub.s32 %s32, %s44
      %s123 = ssub.s32 %s33, %s40
      %s124 = sor.u32 %s122, %s123
      %p125 = scmp.eq.s32.totalorder %s124, 0
      %s127 = sadd.s32 %s126, 1
      %s128 = scalar_select %p125, %s126, %s127
      %p131 = pneg %p125
      %p132 = scmp.eq.s32.totalorder %s25, 1
      %p133 = por %p131, %p132
      %p134 = scmp.ne.s32.totalorder %s126, %s129
      %p135 = scmp.eq.s32.totalorder %s25, 0
      %p136 = por %p134, %p135
      %p137 = scmp.ne.s32.totalorder %s126, %s129
      %p138 = scmp.eq.s32.totalorder %s30, 1
      %p139 = por %p137, %p138
      %p140 = scmp.ne.s32.totalorder %s129, %s130
      %p141 = scmp.eq.s32.totalorder %s30, 0
      %p142 = por %p140, %p141
      %p143 = scmp.ne.s32.totalorder %s129, %s130
      %p144 = scmp.eq.s32.totalorder %s31, 1
      %p145 = por %p143, %p144
      %p147 = scmp.ne.s32.totalorder %s130, %s146
      %p148 = scmp.eq.s32.totalorder %s31, 0
      %p149 = por %p147, %p148
      %p150 = scmp.le.s32.totalorder 1, %s25
      %p151 = scmp.lt.s32.totalorder %s25, 3
      %p152 = pnand %p150, %p151
      %p153 = pneg %p152
      // Predicated region
      $region9: #{tpu_custom_call.1} parent=5 // pred_check
        _
      $region10: #{tpu_custom_call.1} parent=5 // pred_check_branch
        %155 = sbr.rel (%p152) target = $region12
      $region11: #{tpu_custom_call.1} parent=5 // pred_region
        %s156 = ssub.s32 %s25, 1
        // Predicated region
        $region13: #{tpu_custom_call.1} parent=11 // pred_check
          %p157 = pneg %p58
        $region14: #{tpu_custom_call.1} parent=11 // pred_check_branch
          %159 = sbr.rel (%p157) target = $region16
        $region15: #{tpu_custom_call.1} parent=11 // pred_region
          %s161 = ssub.s32 64, 64
          %162 = vsyncadd [#allocation7], %s161
          %167 = dma.hbm_to_smem %s1, 64, [#allocation4], [#allocation7], 32, 32, 2
        $region16: #{tpu_custom_call.1} parent=11 // pred_fallthru
          _
      $region12: #{tpu_custom_call.1} parent=5 // pred_fallthru
        _
      %p168 = scmp.lt.s32.totalorder %s25, 2
      // Predicated region
      $region17: #{tpu_custom_call.1} parent=5 // pred_check
        %p169 = pneg %p168
      $region18: #{tpu_custom_call.1} parent=5 // pred_check_branch
        %171 = sbr.rel (%p169) target = $region20
      $region19: #{tpu_custom_call.1} parent=5 // pred_region
        // Predicated region
        $region21: #{tpu_custom_call.1} parent=19 // pred_check
          %p172 = pneg %p80
        $region22: #{tpu_custom_call.1} parent=19 // pred_check_branch
          %174 = sbr.rel (%p172) target = $region24
        $region23: #{tpu_custom_call.1} parent=19 // pred_region
          %s175 = sand.u32 %s70, 1
          %s176 = scalar_lea.sflag [#allocation5], %s175
          %s177 = sand.u32 %s70, 1
          %s178 = smul.addr %s177, 16
          %s179 = scalar_lea.vmem [#allocation8], %s178
          %s180 = smul.u32 2, %s33
          %s182 = ssub.s32 256, 256
          %183 = vsyncadd %s176, %s182
          %s184 = smul.addr %s32, 2
          %s185 = sadd.s32 %s180, %s184
          %s186 = smul.addr %s185, 128
          %s187 = scalar_lea.hbm %s2, %s186
          %s188 = sshll.u32 %s179, 4
          %s189 = int_to_ptr.vmem [resolvable:$true] %s188
          %194 = dma.hbm_to_vmem [thread:$0]  %s187, 256, %s189, %s176, 128, 128, 8
        $region24: #{tpu_custom_call.1} parent=19 // pred_fallthru
          _
      $region20: #{tpu_custom_call.1} parent=5 // pred_fallthru
        _
      %p195 = scmp.le.s32.totalorder 1, %s25
      %p196 = scmp.lt.s32.totalorder %s25, 3
      %p197 = pnand %p195, %p196
      %p198 = pneg %p197
      // Predicated region
      $region25: #{tpu_custom_call.1} parent=5 // pred_check
        _
      $region26: #{tpu_custom_call.1} parent=5 // pred_check_branch
        %200 = sbr.rel (%p197) target = $region28
      $region27: #{tpu_custom_call.1} parent=5 // pred_region
        %s201 = ssub.s32 %s25, 1
        // Predicated region
        $region29: #{tpu_custom_call.1} parent=27 // pred_check
          %p202 = pneg %p58
        $region30: #{tpu_custom_call.1} parent=27 // pred_check_branch
          %204 = sbr.rel (%p202) target = $region32
        $region31: #{tpu_custom_call.1} parent=27 // pred_region
          %205 = dma.done [#allocation7], 64
        $region32: #{tpu_custom_call.1} parent=27 // pred_fallthru
          _
        %s206 = sand.u32 %s73, 1
        %s207 = scalar_lea.sflag [#allocation5], %s206
        %s208 = sand.u32 %s73, 1
        %s209 = smul.addr %s208, 16
        %s210 = scalar_lea.vmem [#allocation8], %s209
        // Predicated region
        $region33: #{tpu_custom_call.1} parent=27 // pred_check
          %p211 = pneg %p86
        $region34: #{tpu_custom_call.1} parent=27 // pred_check_branch
          %213 = sbr.rel (%p211) target = $region36
        $region35: #{tpu_custom_call.1} parent=27 // pred_region
          %214 = dma.done %s207, 256
        $region36: #{tpu_custom_call.1} parent=27 // pred_fallthru
          _
        %215 = sfence
        %p216 = pneg %p58
        %p217 = pneg %p55
        %s218 = sand.u32 %s73, 1
        %s219 = scalar_lea.sflag [#allocation5], %s218
        %s220 = sand.u32 %s73, 1
        %s221 = smul.addr %s220, 16
        %s222 = scalar_lea.vmem [#allocation8], %s221
        %p223 = pneg %p86
        %p224 = pneg %p83
        %p225 = pneg %p114
        %p226 = pneg %p111
        %s227 = sand.u32 %s101, 1
        %s228 = scalar_lea.sflag [#allocation6], %s227
        %s229 = sand.u32 %s101, 1
        %s230 = smul.addr %s229, 208
        %s231 = scalar_lea.vmem [#allocation9], %s230
        %p232 = pneg %p142
        %p233 = pneg %p139
        %s234 = sand.u32 %s129, 1
        %s235 = scalar_lea.sflag [#allocation11], %s234
        %s236 = sand.u32 %s129, 1
        %s237 = scalar_lea.vmem [#allocation10], %s236
        %s238 = smul.u32 2, %s35
        %s239 = smul.u32 2, %s35
        %s240 = smul.u32 %s34, 128
        %s241 = sld [smem:[#allocation3 + %s240]]
        %s242 = sadd.s32 %s240, 1
        %s243 = sld [smem:[#allocation3 + %s242]]
        %p244 = scmp.gt.s32.totalorder %s241, 0
        // Predicated region
        $region37: #{tpu_custom_call.1} parent=27 // pred_check
          %p245 = pneg %p244
        $region38: #{tpu_custom_call.1} parent=27 // pred_check_branch
          %247 = sbr.rel (%p245) target = $region40
        $region39: #{tpu_custom_call.1} parent=27 // pred_region
          %v248 = vld [vmem:[%s210] sm:$0xff]
          %v249 = vld [vmem:[%s210 + $0x8] sm:$0xff]
          %v250 = vlaneseq
          %v251 = vshrl.u32 %v250, 7
          %v252 = vadd.s32 %v251, 8
          %s253 = smul.u32 %s35, 16
          %v254 = vstv %s253
          %v255 = vadd.s32 %v251, %v254
          %v256 = vadd.s32 %v252, %v254
          %v257 = vcvt.s32.f32 %v255
          %v258 = vcvt.s32.f32 %v256
          %v259 = vlaneseq
          %v260 = vand.u32 %v259, 127
          %v261 = vcvt.s32.f32 %v260
          // While loop
          $region41: #{tpu_custom_call.1} parent=39 // loop_pre_header
            _
          $region42: #{tpu_custom_call.1} parent=39 // loop_header
            %s263 = sphi 0, %s265
            %p264 = scmp.ge.s32.totalorder %s263, %s243
            %v268 = vphi -10000.0, %v287
            %v269 = vphi -10000.0, %v288
            %v270 = vphi -10000.0, %v295
            %v271 = vphi -10000.0, %v296
            %v272 = vphi 0.0, %v318
          $region43: #{tpu_custom_call.1} parent=39 // loop_header_branch
            %267 = sbr.rel (%p264) target = $region47
          $region44: #{tpu_custom_call.1} parent=39 // loop_body
            %s273 = sadd.s32 %s263, 1
            %v274 = vstv %s273
            %vm275 = vcmp.eq.s32.totalorder %v248, %v274
            %vm276 = vcmp.eq.s32.totalorder %v249, %v274
            %s277 = sshra.s32 %s263, 7
            %s278 = sand.u32 %s263, 127
            %s279 = smul.u32 %s34, 2
            %s280 = sadd.s32 %s277, %s279
            %s281 = smul.u32 %s280, 128
            %s282 = sshra.s32 %s263, 7
            %s283 = sand.u32 %s263, 127
            %s284 = sadd.s32 %s281, %s283
            %s285 = sld [smem:[#allocation4 + %s284]]
            %v286 = vstv %s285
            %v287 = vsel %vm275, %v286, %v268
            %v288 = vsel %vm276, %v286, %v269
            %s289 = sadd.s32 %s277, 1
            %s290 = sadd.s32 %s289, %s279
            %s291 = smul.u32 %s290, 128
            %s292 = sadd.s32 %s291, %s283
            %s293 = sld [smem:[#allocation4 + %s292]]
            %v294 = vstv %s293
            %v295 = vsel %vm275, %v294, %v270
            %v296 = vsel %vm276, %v294, %v271
            %v297 = vsel %vm275, 1, 0
            %v298 = vsel %vm276, 1, 0
            %v299 = vcvt.s32.f32 %v297
            %v300 = vcvt.s32.f32 %v298
            %vm301 = vcmask 130048
            %v302 = vsel %vm301, %v299, -inf
            %303 = vmax.xlane.f32.xlu0 %v302
            %v304 = vpop.xlane.xlu0 %303
            %v305 = vsel %vm301, %v300, -inf
            %306 = vmax.xlane.f32.xlu0 %v305
            %v307 = vpop.xlane.xlu0 %306
            %v308 = vmax.f32 %v304, %v307
            %v309 = vrot.slane %v308, 4
            %v310 = vmax.f32 %v308, %v309
            %v311 = vrot.slane %v310, 2
            %v312 = vmax.f32 %v310, %v311
            %v313 = vrot.slane %v312, 1
            %v314 = vmax.f32 %v312, %v313
            %v315 = vstv %s263
            %vm316 = vcmp.eq.s32.totalorder %v260, %v315
            %v317 = vsel %vm316, %v314, 0.0
            %v318 = vmax.f32 %v272, %v317
          $region45: #{tpu_custom_call.1} parent=39 // loop_footer
            %s265 = sadd.s32 %s263, 1
          $region46: #{tpu_custom_call.1} parent=39 // loop_footer_branch
            %262 = sbr.rel target = $region42
          $region47: #{tpu_custom_call.1} parent=39 // loop_exit
            _
          %v319 = vsub.f32 %v270, %v257
          %v320 = vsub.f32 %v271, %v258
          %v321 = vsub.f32 %v268, %v261
          %v322 = vsub.f32 %v269, %v261
          %vm323 = vcmp.gt.s32.totalorder %v248, 0
          %vm324 = vcmp.gt.s32.totalorder %v249, 0
          %v325 = vsel %vm323, 1, 0
          %v326 = vsel %vm324, 1, 0
          %v327 = vcvt.s32.f32 %v325
          %v328 = vcvt.s32.f32 %v326
          %v329 = vand.u32 2147483647, %v319
          %v330 = vand.u32 2147483647, %v320
          %vm331 = vcmp.lt.f32.partialorder %v329, 3.0
          %vm332 = vcmp.lt.f32.partialorder %v330, 3.0
          %v333 = vand.u32 2147483647, %v321
          %v334 = vand.u32 2147483647, %v322
          %vm335 = vcmp.lt.f32.partialorder %v333, 3.0
          %vm336 = vcmp.lt.f32.partialorder %v334, 3.0
          %vm337 = vmand %vm331, %vm335
          %vm338 = vmand %vm332, %vm336
          %v339 = vsel %vm337, 1, 0
          %v340 = vsel %vm338, 1, 0
          %v341 = vcvt.s32.f32 %v339
          %v342 = vcvt.s32.f32 %v340
          %v343 = vmul.f32 %v319, %v319
          %v344 = vmul.f32 %v320, %v320
          %v345 = vmul.f32 %v321, %v321
          %v346 = vmul.f32 %v322, %v322
          %v347 = vadd.f32 %v343, %v345
          %v348 = vadd.f32 %v344, %v346
          %vm349 = vcmp.gt.f32.partialorder %v347, 0.0
          %vm350 = vcmp.gt.f32.partialorder %v348, 0.0
          %v351 = vsel %vm349, %v347, 1.0
          %v352 = vsel %vm350, %v348, 1.0
          %v353 = vrsqrt.pop %v351
          %v354 = vrsqrt.pop %v352
          %v355 = vmul.f32 %v347, %v353
          %v356 = vmul.f32 %v348, %v354
          %v357 = vmul.f32 %v355, %v327
          %v358 = vmul.f32 %v356, %v328
          %v359 = vmul.f32 %v321, %v353
          %v360 = vmul.f32 %v322, %v354
          %v361 = vsel %vm349, %v359, 0.0
          %v362 = vsel %vm350, %v360, 0.0
          %v363 = vmul.f32 %v361, %v327
          %v364 = vmul.f32 %v362, %v328
          %v365 = vmul.f32 %v319, %v353
          %v366 = vmul.f32 %v320, %v354
          %v367 = vsel %vm349, %v365, 1.0
          %v368 = vsel %vm350, %v366, 1.0
          %v369 = vmul.f32 %v367, %v327
          %v370 = vmul.f32 %v368, %v328
          %v371 = vmin.f32 %v329, %v333
          %v372 = vmin.f32 %v330, %v334
          %v373 = vmax.f32 %v329, %v333
          %v374 = vmax.f32 %v330, %v334
          %v375 = vmul.f32 %v373, 0.41421357
          %v376 = vmul.f32 %v374, 0.41421357
          %vm377 = vcmp.gt.f32.partialorder %v371, %v375
          %vm378 = vcmp.gt.f32.partialorder %v372, %v376
          %v379 = vsub.f32 %v371, %v373
          %v380 = vsub.f32 %v372, %v374
          %v381 = vsel %vm377, %v379, %v371
          %v382 = vsel %vm378, %v380, %v372
          %v383 = vadd.f32 %v371, %v373
          %v384 = vadd.f32 %v372, %v374
          %v385 = vsel %vm377, %v383, %v373
          %v386 = vsel %vm378, %v384, %v374
          %v387 = vmax.f32 %v385, 1e-30
          %v388 = vmax.f32 %v386, 1e-30
          %v389 = vrcp.pop %v387
          %v390 = vmul.f32 %v381, %v389
          %v391 = vrcp.pop %v388
          %v392 = vmul.f32 %v382, %v391
          %v393 = vmul.f32 %v390, %v390
          %v394 = vmul.f32 %v392, %v392
          %v395 = vmul.f32 %v393, 0.080537446
          %v396 = vmul.f32 %v394, 0.080537446
          %v397 = vsub.f32 %v395, 0.13877685
          %v398 = vsub.f32 %v396, 0.13877685
          %v399 = vmul.f32 %v397, %v393
          %v400 = vmul.f32 %v398, %v394
          %v401 = vadd.f32 %v399, 0.19977711
          %v402 = vadd.f32 %v400, 0.19977711
          %v403 = vmul.f32 %v401, %v393
          %v404 = vmul.f32 %v402, %v394
          %v405 = vsub.f32 %v403, 0.3333295
          %v406 = vsub.f32 %v404, 0.3333295
          %v407 = vmul.f32 %v405, %v393
          %v408 = vmul.f32 %v406, %v394
          %v409 = vmul.f32 %v407, %v390
          %v410 = vmul.f32 %v408, %v392
          %v411 = vadd.f32 %v409, %v390
          %v412 = vadd.f32 %v410, %v392
          %v413 = vadd.f32 %v411, 0.7853982
          %v414 = vadd.f32 %v412, 0.7853982
          %v415 = vsel %vm377, %v413, %v411
          %v416 = vsel %vm378, %v414, %v412
          %vm417 = vcmp.gt.f32.partialorder %v333, %v329
          %vm418 = vcmp.gt.f32.partialorder %v334, %v330
          %v419 = vsub.f32 1.5707964, %v415
          %v420 = vsub.f32 1.5707964, %v416
          %v421 = vsel %vm417, %v419, %v415
          %v422 = vsel %vm418, %v420, %v416
          %vm423 = vcmp.lt.f32.partialorder %v319, 0.0
          %vm424 = vcmp.lt.f32.partialorder %v320, 0.0
          %v425 = vsub.f32 3.1415927, %v421
          %v426 = vsub.f32 3.1415927, %v422
          %v427 = vsel %vm423, %v425, %v421
          %v428 = vsel %vm424, %v426, %v422
          %vm429 = vcmp.lt.f32.partialorder %v321, 0.0
          %vm430 = vcmp.lt.f32.partialorder %v322, 0.0
          %v431 = vsub.f32 0.0, %v427
          %v432 = vsub.f32 0.0, %v428
          %v433 = vsel %vm429, %v431, %v427
          %v434 = vsel %vm430, %v432, %v428
          %vm435 = vcmask 130048
          %436 = vst.msk [vmem:[%s231] sm:$0xff] %vm435, %v357
          %437 = vst.msk [vmem:[%s231 + $0x8] sm:$0xff] %vm435, %v358
          %s438 = scalar_lea.vmem %s231, 16 [#allocation9]
          %439 = vst.msk [vmem:[%s438] sm:$0xff] %vm435, %v433
          %440 = vst.msk [vmem:[%s438 + $0x8] sm:$0xff] %vm435, %v434
          %s441 = scalar_lea.vmem %s231, 32 [#allocation9]
          %442 = vst.msk [vmem:[%s441] sm:$0xff] %vm435, %v363
          %443 = vst.msk [vmem:[%s441 + $0x8] sm:$0xff] %vm435, %v364
          %s444 = scalar_lea.vmem %s231, 48 [#allocation9]
          %445 = vst.msk [vmem:[%s444] sm:$0xff] %vm435, %v369
          %446 = vst.msk [vmem:[%s444 + $0x8] sm:$0xff] %vm435, %v370
          %v447 = vsub.f32 1.0, %v341
          %v448 = vsub.f32 1.0, %v342
          %s449 = scalar_lea.vmem %s231, 64 [#allocation9]
          %450 = vst.msk [vmem:[%s449] sm:$0xff] %vm435, %v447
          %451 = vst.msk [vmem:[%s449 + $0x8] sm:$0xff] %vm435, %v448
          %s452 = scalar_lea.vmem %s231, 80 [#allocation9]
          %453 = vst.msk [vmem:[%s452] sm:$0xff] %vm435, %v341
          %454 = vst.msk [vmem:[%s452 + $0x8] sm:$0xff] %vm435, %v342
          %s455 = scalar_lea.vmem %s231, 96 [#allocation9]
          %456 = vst.msk [vmem:[%s455] sm:$0xff] %vm435, 0.0
          %457 = vst.msk [vmem:[%s455 + $0x8] sm:$0xff] %vm435, 0.0
          %s458 = scalar_lea.vmem %s231, 112 [#allocation9]
          %459 = vst.msk [vmem:[%s458] sm:$0xff] %vm435, 0.0
          %460 = vst.msk [vmem:[%s458 + $0x8] sm:$0xff] %vm435, 0.0
          %s461 = scalar_lea.vmem %s231, 128 [#allocation9]
          %462 = vst.msk [vmem:[%s461] sm:$0xff] %vm435, 0.0
          %463 = vst.msk [vmem:[%s461 + $0x8] sm:$0xff] %vm435, 0.0
          %s464 = scalar_lea.vmem %s231, 144 [#allocation9]
          %465 = vst.msk [vmem:[%s464] sm:$0xff] %vm435, 0.0
          %466 = vst.msk [vmem:[%s464 + $0x8] sm:$0xff] %vm435, 0.0
          %s467 = scalar_lea.vmem %s231, 160 [#allocation9]
          %468 = vst.msk [vmem:[%s467] sm:$0xff] %vm435, 0.0
          %469 = vst.msk [vmem:[%s467 + $0x8] sm:$0xff] %vm435, 0.0
          %s470 = scalar_lea.vmem %s231, 176 [#allocation9]
          %471 = vst.msk [vmem:[%s470] sm:$0xff] %vm435, 0.0
          %472 = vst.msk [vmem:[%s470 + $0x8] sm:$0xff] %vm435, 0.0
          %s473 = scalar_lea.vmem %s231, 192 [#allocation9]
          %474 = vst.msk [vmem:[%s473] sm:$0xff] %vm435, 0.0
          %475 = vst.msk [vmem:[%s473 + $0x8] sm:$0xff] %vm435, 0.0
          %476 = vst [vmem:[%s237] sm:$0x1] %v272
        $region40: #{tpu_custom_call.1} parent=27 // pred_fallthru
          _
        %p477 = scmp.eq.s32.totalorder %s241, 0
        // Predicated region
        $region48: #{tpu_custom_call.1} parent=27 // pred_check
          %p478 = pneg %p477
        $region49: #{tpu_custom_call.1} parent=27 // pred_check_branch
          %480 = sbr.rel (%p478) target = $region51
        $region50: #{tpu_custom_call.1} parent=27 // pred_region
          %vm481 = vcmask 130048
          %482 = vst.msk [vmem:[%s231] sm:$0xff] %vm481, 0.0
          %483 = vst.msk [vmem:[%s231 + $0x8] sm:$0xff] %vm481, 0.0
          %s484 = scalar_lea.vmem %s231, 16 [#allocation9]
          %485 = vst.msk [vmem:[%s484] sm:$0xff] %vm481, 0.0
          %486 = vst.msk [vmem:[%s484 + $0x8] sm:$0xff] %vm481, 0.0
          %s487 = scalar_lea.vmem %s231, 32 [#allocation9]
          %488 = vst.msk [vmem:[%s487] sm:$0xff] %vm481, 0.0
          %489 = vst.msk [vmem:[%s487 + $0x8] sm:$0xff] %vm481, 0.0
          %s490 = scalar_lea.vmem %s231, 48 [#allocation9]
          %491 = vst.msk [vmem:[%s490] sm:$0xff] %vm481, 0.0
          %492 = vst.msk [vmem:[%s490 + $0x8] sm:$0xff] %vm481, 0.0
          %s493 = scalar_lea.vmem %s231, 64 [#allocation9]
          %494 = vst.msk [vmem:[%s493] sm:$0xff] %vm481, 1.0
          %495 = vst.msk [vmem:[%s493 + $0x8] sm:$0xff] %vm481, 1.0
          %s496 = scalar_lea.vmem %s231, 80 [#allocation9]
          %497 = vst.msk [vmem:[%s496] sm:$0xff] %vm481, 0.0
          %498 = vst.msk [vmem:[%s496 + $0x8] sm:$0xff] %vm481, 0.0
          %s499 = scalar_lea.vmem %s231, 96 [#allocation9]
          %500 = vst.msk [vmem:[%s499] sm:$0xff] %vm481, 0.0
          %501 = vst.msk [vmem:[%s499 + $0x8] sm:$0xff] %vm481, 0.0
          %s502 = scalar_lea.vmem %s231, 112 [#allocation9]
          %503 = vst.msk [vmem:[%s502] sm:$0xff] %vm481, 0.0
          %504 = vst.msk [vmem:[%s502 + $0x8] sm:$0xff] %vm481, 0.0
          %s505 = scalar_lea.vmem %s231, 128 [#allocation9]
          %506 = vst.msk [vmem:[%s505] sm:$0xff] %vm481, 0.0
          %507 = vst.msk [vmem:[%s505 + $0x8] sm:$0xff] %vm481, 0.0
          %s508 = scalar_lea.vmem %s231, 144 [#allocation9]
          %509 = vst.msk [vmem:[%s508] sm:$0xff] %vm481, 0.0
          %510 = vst.msk [vmem:[%s508 + $0x8] sm:$0xff] %vm481, 0.0
          %s511 = scalar_lea.vmem %s231, 160 [#allocation9]
          %512 = vst.msk [vmem:[%s511] sm:$0xff] %vm481, 0.0
          %513 = vst.msk [vmem:[%s511 + $0x8] sm:$0xff] %vm481, 0.0
          %s514 = scalar_lea.vmem %s231, 176 [#allocation9]
          %515 = vst.msk [vmem:[%s514] sm:$0xff] %vm481, 0.0
          %516 = vst.msk [vmem:[%s514 + $0x8] sm:$0xff] %vm481, 0.0
          %s517 = scalar_lea.vmem %s231, 192 [#allocation9]
          %518 = vst.msk [vmem:[%s517] sm:$0xff] %vm481, 0.0
          %519 = vst.msk [vmem:[%s517 + $0x8] sm:$0xff] %vm481, 0.0
          %520 = vst [vmem:[%s237] sm:$0x1] 0.0
        $region51: #{tpu_custom_call.1} parent=27 // pred_fallthru
          _
        %s521 = sand.u32 %s101, 1
        %s522 = scalar_lea.sflag [#allocation6], %s521
        %s523 = sand.u32 %s101, 1
        %s524 = smul.addr %s523, 208
        %s525 = scalar_lea.vmem [#allocation9], %s524
        %s526 = sand.u32 %s129, 1
        %s527 = scalar_lea.sflag [#allocation11], %s526
        %s528 = sand.u32 %s129, 1
        %s529 = scalar_lea.vmem [#allocation10], %s528
        // Predicated region
        $region52: #{tpu_custom_call.1} parent=27 // pred_check
          %p530 = pneg %p111
        $region53: #{tpu_custom_call.1} parent=27 // pred_check_branch
          %532 = sbr.rel (%p530) target = $region55
        $region54: #{tpu_custom_call.1} parent=27 // pred_region
          %s533 = smul.u32 2, %s35
          %s535 = ssub.s32 3328, 3328
          %536 = vsyncadd %s522, %s535
          %s537 = smul.addr %s34, 26
          %s538 = sadd.s32 %s533, %s537
          %s539 = smul.addr %s538, 128
          %s540 = scalar_lea.hbm %s3, %s539
          %s541 = sshll.u32 %s525, 4
          %s542 = int_to_ptr.vmem [resolvable:$true] %s541
          %547 = dma.vmem_to_hbm [thread:$0]  %s542, 3328, %s540, %s522, 128, 128, 8
        $region55: #{tpu_custom_call.1} parent=27 // pred_fallthru
          _
        // Predicated region
        $region56: #{tpu_custom_call.1} parent=27 // pred_check
          %p548 = pneg %p139
        $region57: #{tpu_custom_call.1} parent=27 // pred_check_branch
          %550 = sbr.rel (%p548) target = $region59
        $region58: #{tpu_custom_call.1} parent=27 // pred_region
          %s552 = ssub.s32 16, 16
          %553 = vsyncadd %s527, %s552
          %s554 = sadd.s32 %s35, %s34
          %s555 = smul.addr %s554, 16
          %s556 = scalar_lea.hbm %s4, %s555
          %s558 = sshll.u32 %s529, 4
          %s559 = int_to_ptr.vmem [resolvable:$true] %s558
          %561 = dma.vmem_to_hbm [thread:$0]  %s559, 16, %s556, %s527
        $region59: #{tpu_custom_call.1} parent=27 // pred_fallthru
          _
      $region28: #{tpu_custom_call.1} parent=5 // pred_fallthru
        _
      %p562 = scmp.le.s32.totalorder 2, %s25
      // Predicated region
      $region60: #{tpu_custom_call.1} parent=5 // pred_check
        %p563 = pneg %p562
      $region61: #{tpu_custom_call.1} parent=5 // pred_check_branch
        %565 = sbr.rel (%p563) target = $region63
      $region62: #{tpu_custom_call.1} parent=5 // pred_region
        %s566 = ssub.s32 %s25, 2
        // Predicated region
        $region64: #{tpu_custom_call.1} parent=62 // pred_check
          %p567 = pneg %p117
        $region65: #{tpu_custom_call.1} parent=62 // pred_check_branch
          %569 = sbr.rel (%p567) target = $region67
        $region66: #{tpu_custom_call.1} parent=62 // pred_region
          %s570 = sand.u32 %s102, 1
          %s571 = scalar_lea.sflag [#allocation6], %s570
          %s572 = sand.u32 %s102, 1
          %s573 = smul.addr %s572, 208
          %s574 = scalar_lea.vmem [#allocation9], %s573
          %575 = dma.done %s571, 3328
        $region67: #{tpu_custom_call.1} parent=62 // pred_fallthru
          _
        // Predicated region
        $region68: #{tpu_custom_call.1} parent=62 // pred_check
          %p576 = pneg %p145
        $region69: #{tpu_custom_call.1} parent=62 // pred_check_branch
          %578 = sbr.rel (%p576) target = $region71
        $region70: #{tpu_custom_call.1} parent=62 // pred_region
          %s579 = sand.u32 %s130, 1
          %s580 = scalar_lea.sflag [#allocation11], %s579
          %s581 = sand.u32 %s130, 1
          %s582 = scalar_lea.vmem [#allocation10], %s581
          %583 = dma.done %s580, 16
        $region71: #{tpu_custom_call.1} parent=62 // pred_fallthru
          _
      $region63: #{tpu_custom_call.1} parent=5 // pred_fallthru
        _
    $region6: #{tpu_custom_call.1} parent=1 // loop_footer
      %s29 = sadd.s32 1, %s25
    $region7: #{tpu_custom_call.1} parent=1 // loop_footer_branch
      %24 = sbr.rel target = $region3
    $region8: #{tpu_custom_call.1} parent=1 // loop_exit
      _
    %584 = vsyncpa [#allocation5], 1
    %s585 = scalar_lea.sflag [#allocation5], 1
    %586 = vsyncpa %s585, 1
    %587 = vsyncpa [#allocation6], 1
    %s588 = scalar_lea.sflag [#allocation6], 1
    %589 = vsyncpa %s588, 1
    %590 = vsyncpa [#allocation11], 1
    %s591 = scalar_lea.sflag [#allocation11], 1
    %592 = vsyncpa %s591, 1
    %593 = vsyncpa [#allocation7], 1
    %s594 = scalar_lea.sflag [#allocation7], 1
    %595 = vsyncpa %s594, 1

</llo_original>
